<compile_context>
chip_gen: v6e
topology: v6e:2x2x1
jax: 0.10.0
libtpu: 0.0.40
codegen_flags: <defaults>
</compile_context>

<pallas_src>
import functools

import jax
import jax.numpy as jnp
from jax.experimental import pallas as pl
from jax.experimental.pallas import tpu as pltpu


def _triplet_loss_kernel(margin_ref, hq_ref, hp_ref, hn_ref, out_ref, acc_ref,
                         *, block_rows, batch, steps_per_core, needs_mask):
    c = pl.program_id(0)     # TensorCore split axis ("parallel")
    i = pl.program_id(1)     # batch-tile stream within this core ("arbitrary")

    @pl.when(i == 0)
    def _init():
        acc_ref[...] = jnp.zeros_like(acc_ref)

    hq = hq_ref[...].astype(jnp.float32)
    hp = hp_ref[...].astype(jnp.float32)
    hn = hn_ref[...].astype(jnp.float32)

    # sum((hq-hp)^2 - (hq-hn)^2, axis=1) == sum((hn-hp)*(2hq-hp-hn), axis=1):
    # one product stream + one lane (XLU) reduction instead of two of each.
    diff_sum = jnp.sum((hn - hp) * (2.0 * hq - hp - hn),
                       axis=1, keepdims=True)                     # (TB, 1)

    # margin_ref[0] holds margin * D * D (raw-sum domain); the 1/(B*D) scale
    # is applied once at finalize.
    hinge = jnp.maximum(margin_ref[0] + diff_sum, jnp.float32(0.0))  # (TB, 1)

    if needs_mask:
        # Only tiles overhanging the real batch (ragged last tile, or the
        # clamped padding tiles of the core split) pay for the iota+where.
        row0 = (c * steps_per_core + i) * block_rows
        is_full = row0 + block_rows <= batch

        @pl.when(is_full)
        def _acc_full():
            acc_ref[...] += hinge

        @pl.when(jnp.logical_not(is_full))
        def _acc_masked():
            rows = row0 + jax.lax.broadcasted_iota(jnp.int32, hinge.shape, 0)
            acc_ref[...] += jnp.where(rows < batch, hinge, jnp.float32(0.0))
    else:
        acc_ref[...] += hinge

    @pl.when(i == pl.num_programs(1) - 1)
    def _finish():
        # Per-core partial sum of raw hinge values, broadcast over a
        # lane-dense (1, 8, 128) output block; wrapper adds cores and scales.
        out_ref[...] = jnp.zeros_like(out_ref) + jnp.sum(acc_ref[...])


def _vmem_budget_bytes():
    """Returns (pipeline-tile budget, vmem_limit_bytes), generation aware."""
    try:
        cap = int(pltpu.get_tpu_info().vmem_capacity_bytes)
    except Exception:
        cap = 0
    if cap >= 100 * 1024 * 1024:          # 128 MiB parts (v5e / v6e)
        return 56 * 1024 * 1024, 96 * 1024 * 1024
    # 64 MiB parts (v7x) or unknown generation: leave ~8 MiB headroom.
    return 36 * 1024 * 1024, 56 * 1024 * 1024


def _choose_block_rows(batch, feat, itemsize, budget_bytes):
    # Per-row VMEM bytes with the feature dim lane-padded to a multiple of 128:
    #   3 inputs x 2 pipeline buffers at the stored dtype
    # + ~3 rows of f32 upcast / fused-product temporaries
    # + the lane-padded (TB, 1) f32 hinge accumulator row.
    d_pad = ((feat + 127) // 128) * 128
    per_row = 3 * 2 * d_pad * itemsize + 3 * d_pad * 4 + 512
    rows = budget_bytes // per_row
    rows = max(16, (rows // 16) * 16)   # multiple of 16 keeps bf16 (16,128) tiling happy
    if rows >= batch:
        return batch                    # single full-batch block
    return int(rows)


_NUM_CORE_SPLITS = 2   # v7x has 2 TensorCores per chip; harmless on 1-TC chips.


def triplet_loss(H_q, H_p, H_n, margin=0.5, *, block_rows=None,
                 core_splits=_NUM_CORE_SPLITS):
    """Pallas TPU implementation of TripletLoss.forward. Returns a scalar."""
    assert H_q.shape == H_p.shape == H_n.shape and H_q.ndim == 2
    B, D = H_q.shape
    itemsize = jnp.dtype(H_q.dtype).itemsize

    budget, vmem_limit = _vmem_budget_bytes()
    if block_rows is None:
        block_rows = _choose_block_rows(B, D, itemsize, budget)
    TB = min(int(block_rows), B)

    total_steps = pl.cdiv(B, TB)
    ncores = max(1, min(int(core_splits), total_steps))
    steps_per_core = pl.cdiv(total_steps, ncores)
    last_block = total_steps - 1
    needs_mask = (ncores * steps_per_core * TB) > B

    def in_map(c, i):
        # Shard batch tiles across cores; clamp the padded tail so the DMA
        # never walks past the array (those rows are masked out in-kernel).
        return (jnp.minimum(c * steps_per_core + i, last_block), 0)

    # margin passed through SMEM (no recompile per margin value), pre-scaled
    # into the raw-sum domain: margin * D * D.
    margin_arr = jnp.array([float(margin) * float(D) * float(D)],
                           dtype=jnp.float32)

    kernel = functools.partial(
        _triplet_loss_kernel,
        block_rows=TB, batch=B, steps_per_core=steps_per_core,
        needs_mask=needs_mask)

    partials = pl.pallas_call(
        kernel,
        out_shape=jax.ShapeDtypeStruct((ncores, 8, 128), jnp.float32),
        grid=(ncores, steps_per_core),
        in_specs=[
            pl.BlockSpec(memory_space=pltpu.MemorySpace.SMEM),    # margin*D^2
            pl.BlockSpec((TB, D), in_map),                        # H_q
            pl.BlockSpec((TB, D), in_map),                        # H_p
            pl.BlockSpec((TB, D), in_map),                        # H_n
        ],
        out_specs=pl.BlockSpec((1, 8, 128), lambda c, i: (c, 0, 0)),
        scratch_shapes=[pltpu.VMEM((TB, 1), jnp.float32)],        # hinge accum
        compiler_params=pltpu.CompilerParams(
            dimension_semantics=("parallel", "arbitrary"),
            vmem_limit_bytes=vmem_limit),
        cost_estimate=pl.CostEstimate(
            flops=6 * B * D,
            transcendentals=0,
            bytes_accessed=3 * B * D * itemsize + ncores * 8 * 128 * 4),
    )(margin_arr, H_q, H_p, H_n)

    # Per-core raw hinge sums -> mean over the batch (plus the deferred 1/D).
    return jnp.sum(partials[:, 0, 0]) / jnp.float32(B * D)


def triplet_loss_ref(H_q, H_p, H_n, margin=0.5):
    """Pure-JAX reference matching the PyTorch module."""
    H_q = H_q.astype(jnp.float32)
    H_p = H_p.astype(jnp.float32)
    H_n = H_n.astype(jnp.float32)
    margin_val = margin * H_q.shape[1]
    pos = jnp.mean((H_q - H_p) ** 2, axis=1)
    neg = jnp.mean((H_q - H_n) ** 2, axis=1)
    loss = jnp.maximum(jnp.zeros_like(neg), margin_val - neg + pos)
    return jnp.mean(loss)


if __name__ == "__main__":
    # 1) Small f32 case (single full-batch block, single core used).
    k_q, k_p, k_n = jax.random.split(jax.random.PRNGKey(0), 3)
    B, D = 8, 32
    H_q = jax.random.normal(k_q, (B, D), dtype=jnp.float32)
    H_p = jax.random.normal(k_p, (B, D), dtype=jnp.float32)
    H_n = jax.random.normal(k_n, (B, D), dtype=jnp.float32)
    out = jax.block_until_ready(triplet_loss(H_q, H_p, H_n, margin=0.5))
    ref = triplet_loss_ref(H_q, H_p, H_n, margin=0.5)
    assert jnp.allclose(out, ref, rtol=1e-5, atol=1e-5), (out, ref)

    # 2) Ragged tiled case (B not a multiple of the block): exercises the
    #    dual-core split, the clamped padding tiles and the masked tail.
    k_q2, k_p2, k_n2 = jax.random.split(jax.random.PRNGKey(1), 3)
    B2, D2, TB2 = 20, 32, 8
    H_q2 = jax.random.normal(k_q2, (B2, D2), dtype=jnp.float32)
    H_p2 = jax.random.normal(k_p2, (B2, D2), dtype=jnp.float32)
    H_n2 = jax.random.normal(k_n2, (B2, D2), dtype=jnp.float32)
    out2 = jax.block_until_ready(
        triplet_loss(H_q2, H_p2, H_n2, margin=0.5, block_rows=TB2))
    ref2 = triplet_loss_ref(H_q2, H_p2, H_n2, margin=0.5)
    assert jnp.allclose(out2, ref2, rtol=1e-5, atol=1e-5), (out2, ref2)

    # 3) bf16 inputs (DMA'd as bf16, f32 math inside the kernel).
    k_q3, k_p3, k_n3 = jax.random.split(jax.random.PRNGKey(2), 3)
    B3, D3 = 16, 32
    H_q3 = jax.random.normal(k_q3, (B3, D3), dtype=jnp.bfloat16)
    H_p3 = jax.random.normal(k_p3, (B3, D3), dtype=jnp.bfloat16)
    H_n3 = jax.random.normal(k_n3, (B3, D3), dtype=jnp.bfloat16)
    out3 = jax.block_until_ready(triplet_loss(H_q3, H_p3, H_n3, margin=0.5))
    ref3 = triplet_loss_ref(H_q3, H_p3, H_n3, margin=0.5)
    assert jnp.allclose(out3, ref3, rtol=1e-4, atol=1e-4), (out3, ref3)

    # 4) Larger multi-step case with D = 128 (lane-dense tiles), ragged batch:
    #    both cores get several pipelined steps, last block is partial.
    k_q4, k_p4, k_n4 = jax.random.split(jax.random.PRNGKey(3), 3)
    B4, D4, TB4 = 4000, 128, 512
    H_q4 = jax.random.normal(k_q4, (B4, D4), dtype=jnp.float32)
    H_p4 = jax.random.normal(k_p4, (B4, D4), dtype=jnp.float32)
    H_n4 = jax.random.normal(k_n4, (B4, D4), dtype=jnp.float32)
    out4 = jax.block_until_ready(
        triplet_loss(H_q4, H_p4, H_n4, margin=0.5, block_rows=TB4))
    ref4 = triplet_loss_ref(H_q4, H_p4, H_n4, margin=0.5)
    assert jnp.allclose(out4, ref4, rtol=1e-4, atol=1e-4), (out4, ref4)

    print("KERNEL_OK")
</pallas_src>

<mosaic_0001>
module attributes {stable_mosaic.version = 11 : i64} {
  func.func @_triplet_loss_kernel(%arg0: i32, %arg1: i32, %arg2: memref<1xf32, #tpu.memory_space<smem>>, %arg3: memref<8x32xf32, #tpu.memory_space<vmem>>, %arg4: memref<8x32xf32, #tpu.memory_space<vmem>>, %arg5: memref<8x32xf32, #tpu.memory_space<vmem>>, %arg6: memref<1x8x128xf32, #tpu.memory_space<vmem>>, %arg7: memref<8x1xf32, #tpu.memory_space<vmem>>) attributes {dimension_semantics = [#tpu.dimension_semantics<parallel>, #tpu.dimension_semantics<arbitrary>], iteration_bounds = array<i64: 1, 1>, scalar_prefetch = 0 : i64, scratch_operands = 1 : i64, tpu.core_type = #tpu.core_type<tc>, window_params = [{transform_indices = @transform_0, window_bounds = array<i64: 1>}, {transform_indices = @transform_1, window_bounds = array<i64: 8, 32>}, {transform_indices = @transform_2, window_bounds = array<i64: 8, 32>}, {transform_indices = @transform_3, window_bounds = array<i64: 8, 32>}, {transform_indices = @transform_4, window_bounds = array<i64: 1, 8, 128>}]} {
    %c0_i32 = arith.constant 0 : i32
    %0 = arith.cmpi eq, %arg1, %c0_i32 : i32
    %1 = arith.extui %0 : i1 to i32
    %c0_i32_0 = arith.constant 0 : i32
    %2 = arith.cmpi ne, %1, %c0_i32_0 : i32
    scf.if %2 {
      %cst_15 = arith.constant 0.000000e+00 : f32
      %25 = vector.broadcast %cst_15 : f32 to vector<8x1xf32>
      %c0_16 = arith.constant 0 : index
      %c0_17 = arith.constant 0 : index
      %26 = vector.load %arg7[%c0_16, %c0_17] : memref<8x1xf32, #tpu.memory_space<vmem>>, vector<8x1xf32>
      tpu.vector_store %arg7[%c0_16, %c0_17], %25 {strides = array<i32>} : memref<8x1xf32, #tpu.memory_space<vmem>>, vector<8x1xf32>,
    } else {
    }
    %c0 = arith.constant 0 : index
    %c0_1 = arith.constant 0 : index
    %3 = vector.load %arg3[%c0, %c0_1] : memref<8x32xf32, #tpu.memory_space<vmem>>, vector<8x32xf32>
    %c0_2 = arith.constant 0 : index
    %c0_3 = arith.constant 0 : index
    %4 = vector.load %arg4[%c0_2, %c0_3] : memref<8x32xf32, #tpu.memory_space<vmem>>, vector<8x32xf32>
    %c0_4 = arith.constant 0 : index
    %c0_5 = arith.constant 0 : index
    %5 = vector.load %arg5[%c0_4, %c0_5] : memref<8x32xf32, #tpu.memory_space<vmem>>, vector<8x32xf32>
    %6 = arith.subf %5, %4 : vector<8x32xf32>
    %cst = arith.constant 2.000000e+00 : f32
    %7 = vector.broadcast %cst : f32 to vector<8x32xf32>
    %8 = arith.mulf %7, %3 : vector<8x32xf32>
    %9 = arith.subf %8, %4 : vector<8x32xf32>
    %10 = arith.subf %9, %5 : vector<8x32xf32>
    %11 = arith.mulf %6, %10 : vector<8x32xf32>
    %cst_6 = arith.constant dense<0.000000e+00> : vector<8xf32>
    %12 = vector.multi_reduction <add>, %11, %cst_6 [1] : vector<8x32xf32> to vector<8xf32>
    %13 = vector.shape_cast %12 : vector<8xf32> to vector<8x1xf32>
    %c0_7 = arith.constant 0 : index
    %14 = memref.load %arg2[%c0_7] : memref<1xf32, #tpu.memory_space<smem>>
    %15 = vector.broadcast %14 : f32 to vector<8x1xf32>
    %16 = arith.addf %15, %13 : vector<8x1xf32>
    %cst_8 = arith.constant 0.000000e+00 : f32
    %17 = vector.broadcast %cst_8 : f32 to vector<8x1xf32>
    %18 = arith.maximumf %16, %17 : vector<8x1xf32>
    %c0_9 = arith.constant 0 : index
    %c0_10 = arith.constant 0 : index
    %19 = vector.load %arg7[%c0_9, %c0_10] : memref<8x1xf32, #tpu.memory_space<vmem>>, vector<8x1xf32>
    %20 = arith.addf %19, %18 : vector<8x1xf32>
    %c0_11 = arith.constant 0 : index
    %c0_12 = arith.constant 0 : index
    %21 = vector.load %arg7[%c0_11, %c0_12] : memref<8x1xf32, #tpu.memory_space<vmem>>, vector<8x1xf32>
    tpu.vector_store %arg7[%c0_11, %c0_12], %20 {strides = array<i32>} : memref<8x1xf32, #tpu.memory_space<vmem>>, vector<8x1xf32>,
    %c0_i32_13 = arith.constant 0 : i32
    %22 = arith.cmpi eq, %arg1, %c0_i32_13 : i32
    %23 = arith.extui %22 : i1 to i32
    %c0_i32_14 = arith.constant 0 : i32
    %24 = arith.cmpi ne, %23, %c0_i32_14 : i32
    scf.if %24 {
      %cst_15 = arith.constant 0.000000e+00 : f32
      %25 = vector.broadcast %cst_15 : f32 to vector<1x8x128xf32>
      %c0_16 = arith.constant 0 : index
      %c0_17 = arith.constant 0 : index
      %26 = vector.load %arg7[%c0_16, %c0_17] : memref<8x1xf32, #tpu.memory_space<vmem>>, vector<8x1xf32>
      %27 = vector.shape_cast %26 : vector<8x1xf32> to vector<1x8x1xf32>
      %cst_18 = arith.constant dense<0.000000e+00> : vector<1xf32>
      %28 = vector.multi_reduction <add>, %27, %cst_18 [1, 2] : vector<1x8x1xf32> to vector<1xf32>
      %29 = vector.shape_cast %28 : vector<1xf32> to vector<1x1x1xf32>
      %30 = vector.extract %29[0, 0, 0] : f32 from vector<1x1x1xf32>
      %31 = vector.broadcast %30 : f32 to vector<1x8x128xf32>
      %32 = arith.addf %25, %31 : vector<1x8x128xf32>
      %c0_19 = arith.constant 0 : index
      %c0_20 = arith.constant 0 : index
      %c0_21 = arith.constant 0 : index
      %33 = vector.load %arg6[%c0_19, %c0_20, %c0_21] : memref<1x8x128xf32, #tpu.memory_space<vmem>>, vector<1x8x128xf32>
      tpu.vector_store %arg6[%c0_19, %c0_20, %c0_21], %32 {strides = array<i32>} : memref<1x8x128xf32, #tpu.memory_space<vmem>>, vector<1x8x128xf32>,
    } else {
    }
    return
  }
  func.func @transform_0(%arg0: i32, %arg1: i32) -> i32 {
    %c0_i32 = arith.constant 0 : i32
    %c0_i32_0 = arith.constant 0 : i32
    return %c0_i32 : i32
  }
  func.func @transform_1(%arg0: i32, %arg1: i32) -> (i32, i32) {
    %c1_i32 = arith.constant 1 : i32
    %0 = arith.muli %arg0, %c1_i32 : i32
    %1 = arith.addi %0, %arg1 : i32
    %c0_i32 = arith.constant 0 : i32
    %2 = arith.minsi %1, %c0_i32 : i32
    %c0_i32_0 = arith.constant 0 : i32
    %c0_i32_1 = arith.constant 0 : i32
    return %2, %c0_i32_0 : i32, i32
  }
  func.func @transform_2(%arg0: i32, %arg1: i32) -> (i32, i32) {
    %c1_i32 = arith.constant 1 : i32
    %0 = arith.muli %arg0, %c1_i32 : i32
    %1 = arith.addi %0, %arg1 : i32
    %c0_i32 = arith.constant 0 : i32
    %2 = arith.minsi %1, %c0_i32 : i32
    %c0_i32_0 = arith.constant 0 : i32
    %c0_i32_1 = arith.constant 0 : i32
    return %2, %c0_i32_0 : i32, i32
  }
  func.func @transform_3(%arg0: i32, %arg1: i32) -> (i32, i32) {
    %c1_i32 = arith.constant 1 : i32
    %0 = arith.muli %arg0, %c1_i32 : i32
    %1 = arith.addi %0, %arg1 : i32
    %c0_i32 = arith.constant 0 : i32
    %2 = arith.minsi %1, %c0_i32 : i32
    %c0_i32_0 = arith.constant 0 : i32
    %c0_i32_1 = arith.constant 0 : i32
    return %2, %c0_i32_0 : i32, i32
  }
  func.func @transform_4(%arg0: i32, %arg1: i32) -> (i32, i32, i32) {
    %c0_i32 = arith.constant 0 : i32
    %c0_i32_0 = arith.constant 0 : i32
    %c0_i32_1 = arith.constant 0 : i32
    return %arg0, %c0_i32, %c0_i32_0 : i32, i32, i32
  }
}

</mosaic_0001>

<llo_original>
// kernel: tpu_custom_call.1
$region0: #{tpu_custom_call.1}
  #allocation0 [shape = 'u32[]', space=smem, size = 0x4, offset = 0x4, fixed_abs, tag = 'smem constant byte address 0x4 - core index']
  #allocation1 [shape = 'u32[144,128]{1,0:T(1,128)}', space=vmem, size = 0x12000, scoped, tag = 'internal scratch']
  #allocation2 [shape = 'f32[8,1]{1,0:T(8,128)}', space=vmem, size = 0x1000, scoped, tag = 'scratch operand']
  #allocation3 [shape = 'f32[1]{0:T(128)S(6)}', space=smem, size = 0x200, scoped, tag = 'scoped memory for tpu_custom_call.1']
  %s0 = inlined_call_operand.<no memory space> [shape: f32[1], index: 0, kind: input, shape index: {}]
  %s1 = inlined_call_operand.hbm [shape: f32[8,32], index: 1, kind: input, shape index: {}]
  %s2 = inlined_call_operand.hbm [shape: f32[8,32], index: 2, kind: input, shape index: {}]
  %s3 = inlined_call_operand.hbm [shape: f32[8,32], index: 3, kind: input, shape index: {}]
  %s4 = inlined_call_operand.hbm [shape: f32[1,8,128], index: 4, kind: output, shape index: {}]
  %s5 = sld [smem:[#allocation0]]
  $region46: #{tpu_custom_call.1} parent=0
    _
  %s7 = ssub.s32 1, %s5
  %s8 = scalar_select 0, %s7, %s5
  %9 = sst [smem:[#allocation3]] %s0
  $region1: #{tpu_custom_call.1} parent=0
    #allocation4 [shape = 'u8[4096]{0}', space=vmem, size = 0x1000, scoped, tag = 'input window, operand 1, single buffered']
    #allocation5 [shape = 's32[1]{0}', space=sflag, size = 0x4, scoped, tag = 'scoped memory for tpu_custom_call.1']
    #allocation6 [shape = 's32[1]{0}', space=sflag, size = 0x4, scoped, tag = 'scoped memory for tpu_custom_call.1']
    #allocation7 [shape = 'u8[4096]{0}', space=vmem, size = 0x1000, scoped, tag = 'input window, operand 2, single buffered']
    #allocation8 [shape = 's32[1]{0}', space=sflag, size = 0x4, scoped, tag = 'scoped memory for tpu_custom_call.1']
    #allocation9 [shape = 'u8[4096]{0}', space=vmem, size = 0x1000, scoped, tag = 'input window, operand 3, single buffered']
    #allocation10 [shape = 'u8[4096]{0}', space=vmem, size = 0x1000, scoped, tag = 'output window, operand 0, single buffered']
    %10 = vsyncpa [#allocation5], 0
    %11 = vsyncpa [#allocation8], 0
    %12 = vsyncpa [#allocation6], 0
    // Predicated region
    $region2: #{tpu_custom_call.1} parent=1 // pred_check
      _
    $region3: #{tpu_custom_call.1} parent=1 // pred_check_branch
      %14 = sbr.rel (0) target = $region5
    $region4: #{tpu_custom_call.1} parent=1 // pred_region
      _
    $region5: #{tpu_custom_call.1} parent=1 // pred_fallthru
      _
    // Predicated region
    $region6: #{tpu_custom_call.1} parent=1 // pred_check
      _
    $region7: #{tpu_custom_call.1} parent=1 // pred_check_branch
      %16 = sbr.rel (0) target = $region9
    $region8: #{tpu_custom_call.1} parent=1 // pred_region
      %s17 = sadd.s32 0, 0
      %p18 = scmp.lt.s32.totalorder %s17, 0
      %s19 = scalar_select %p18, %s17, 0
      %s21 = ssub.s32 128, 128
      %22 = vsyncadd [#allocation5], %s21
      %s23 = smul.addr %s19, 128
      %s24 = scalar_lea.hbm %s1, %s23
      %s26 = sshll.u32 [#allocation4], 4
      %s27 = int_to_ptr.vmem [resolvable:$true] %s26
      %29 = dma.hbm_to_vmem [thread:$0]  %s24, 128, %s27, [#allocation5]
    $region9: #{tpu_custom_call.1} parent=1 // pred_fallthru
      _
    // Predicated region
    $region10: #{tpu_custom_call.1} parent=1 // pred_check
      _
    $region11: #{tpu_custom_call.1} parent=1 // pred_check_branch
      %31 = sbr.rel (0) target = $region13
    $region12: #{tpu_custom_call.1} parent=1 // pred_region
      %s32 = sadd.s32 0, 0
      %p33 = scmp.lt.s32.totalorder %s32, 0
      %s34 = scalar_select %p33, %s32, 0
      %s36 = ssub.s32 128, 128
      %37 = vsyncadd [#allocation8], %s36
      %s38 = smul.addr %s34, 128
      %s39 = scalar_lea.hbm %s2, %s38
      %s41 = sshll.u32 [#allocation7], 4
      %s42 = int_to_ptr.vmem [resolvable:$true] %s41
      %44 = dma.hbm_to_vmem [thread:$0]  %s39, 128, %s42, [#allocation8]
    $region13: #{tpu_custom_call.1} parent=1 // pred_fallthru
      _
    // Predicated region
    $region14: #{tpu_custom_call.1} parent=1 // pred_check
      _
    $region15: #{tpu_custom_call.1} parent=1 // pred_check_branch
      %46 = sbr.rel (0) target = $region17
    $region16: #{tpu_custom_call.1} parent=1 // pred_region
      %s47 = sadd.s32 0, 0
      %p48 = scmp.lt.s32.totalorder %s47, 0
      %s49 = scalar_select %p48, %s47, 0
      %s51 = ssub.s32 128, 128
      %52 = vsyncadd [#allocation8], %s51
      %s53 = smul.addr %s49, 128
      %s54 = scalar_lea.hbm %s3, %s53
      %s56 = sshll.u32 [#allocation9], 4
      %s57 = int_to_ptr.vmem [resolvable:$true] %s56
      %59 = dma.hbm_to_vmem [thread:$0]  %s54, 128, %s57, [#allocation8]
    $region17: #{tpu_custom_call.1} parent=1 // pred_fallthru
      _
    // Predicated region
    $region18: #{tpu_custom_call.1} parent=1 // pred_check
      _
    $region19: #{tpu_custom_call.1} parent=1 // pred_check_branch
      %61 = sbr.rel (0) target = $region21
    $region20: #{tpu_custom_call.1} parent=1 // pred_region
      %62 = dma.done [#allocation5], 128
    $region21: #{tpu_custom_call.1} parent=1 // pred_fallthru
      _
    // Predicated region
    $region22: #{tpu_custom_call.1} parent=1 // pred_check
      _
    $region23: #{tpu_custom_call.1} parent=1 // pred_check_branch
      %64 = sbr.rel (0) target = $region25
    $region24: #{tpu_custom_call.1} parent=1 // pred_region
      %65 = dma.done [#allocation8], 128
    $region25: #{tpu_custom_call.1} parent=1 // pred_fallthru
      _
    // Predicated region
    $region26: #{tpu_custom_call.1} parent=1 // pred_check
      _
    $region27: #{tpu_custom_call.1} parent=1 // pred_check_branch
      %67 = sbr.rel (0) target = $region29
    $region28: #{tpu_custom_call.1} parent=1 // pred_region
      %68 = dma.done [#allocation8], 128
    $region29: #{tpu_custom_call.1} parent=1 // pred_fallthru
      _
    %s69 = sadd.s32 0, 0
    %p70 = scmp.lt.s32.totalorder %s69, 0
    %s71 = scalar_select %p70, %s69, 0
    %s72 = sadd.s32 0, 0
    %p73 = scmp.lt.s32.totalorder %s72, 0
    %s74 = scalar_select %p73, %s72, 0
    %s75 = sadd.s32 0, 0
    %p76 = scmp.lt.s32.totalorder %s75, 0
    %s77 = scalar_select %p76, %s75, 0
    %p78 = scmp.eq.s32.totalorder 0, 0
    // Predicated region
    $region30: #{tpu_custom_call.1} parent=1 // pred_check
      %p79 = pneg %p78
    $region31: #{tpu_custom_call.1} parent=1 // pred_check_branch
      %81 = sbr.rel (%p79) target = $region33
    $region32: #{tpu_custom_call.1} parent=1 // pred_region
      %vm82 = vcmask 7168
      %83 = vst.msk [vmem:[#allocation2] sm:$0xff] %vm82, 0.0
    $region33: #{tpu_custom_call.1} parent=1 // pred_fallthru
      _
    %v84 = vld [vmem:[#allocation4] sm:$0xff]
    %v85 = vld [vmem:[#allocation7] sm:$0xff]
    %v86 = vld [vmem:[#allocation9] sm:$0xff]
    %v87 = vsub.f32 %v86, %v85
    %v88 = vmul.f32 %v84, 2.0
    %v89 = vsub.f32 %v88, %v85
    %v90 = vsub.f32 %v89, %v86
    %v91 = vmul.f32 %v87, %v90
    %vm92 = vcmask 261120
    %v93 = vsel %vm92, %v91, 0.0
    %94 = vadd.xlane.f32.xlu0 %v93
    %v95 = vpop.xlane.xlu0 %94
    %s96 = sld [smem:[#allocation3]]
    %v97 = vstv %s96
    %v98 = vadd.f32 %v97, %v95
    %v99 = vmax.f32 %v98, 0.0
    %v100 = vld [vmem:[#allocation2] sm:$0xff]
    %v101 = vadd.f32 %v100, %v99
    %vm102 = vcmask 7168
    %103 = vst.msk [vmem:[#allocation2] sm:$0xff] %vm102, %v101
    // Predicated region
    $region34: #{tpu_custom_call.1} parent=1 // pred_check
      %p104 = pneg %p78
    $region35: #{tpu_custom_call.1} parent=1 // pred_check_branch
      %106 = sbr.rel (%p104) target = $region37
    $region36: #{tpu_custom_call.1} parent=1 // pred_region
      %v107 = vld [vmem:[#allocation2] sm:$0xff]
      %v108 = vsel %vm102, %v107, 0.0
      %109 = vadd.xlane.f32.xlu0 %v108
      %v110 = vpop.xlane.xlu0 %109
      %v111 = vrot.slane %v110, 4
      %v112 = vadd.f32 %v110, %v111
      %v113 = vrot.slane %v112, 2
      %v114 = vadd.f32 %v112, %v113
      %v115 = vrot.slane %v114, 1
      %v116 = vadd.f32 %v114, %v115
      %s117 = vtos %v116
      %v118 = vstv %s117
      %v119 = vadd.f32 %v118, 0.0
      %120 = vst [vmem:[#allocation10] sm:$0xff] %v119
    $region37: #{tpu_custom_call.1} parent=1 // pred_fallthru
      _
    // Predicated region
    $region38: #{tpu_custom_call.1} parent=1 // pred_check
      _
    $region39: #{tpu_custom_call.1} parent=1 // pred_check_branch
      %122 = sbr.rel (0) target = $region41
    $region40: #{tpu_custom_call.1} parent=1 // pred_region
      %s124 = ssub.s32 128, 128
      %125 = vsyncadd [#allocation6], %s124
      %s127 = sshll.u32 [#allocation10], 4
      %s128 = int_to_ptr.vmem [resolvable:$true] %s127
      %130 = dma.vmem_to_hbm [thread:$0]  %s128, 128, %s4, [#allocation6]
    $region41: #{tpu_custom_call.1} parent=1 // pred_fallthru
      _
    // Predicated region
    $region42: #{tpu_custom_call.1} parent=1 // pred_check
      _
    $region43: #{tpu_custom_call.1} parent=1 // pred_check_branch
      %132 = sbr.rel (0) target = $region45
    $region44: #{tpu_custom_call.1} parent=1 // pred_region
      %133 = dma.done [#allocation6], 128
    $region45: #{tpu_custom_call.1} parent=1 // pred_fallthru
      _
    %134 = vsyncpa [#allocation5], 1
    %135 = vsyncpa [#allocation8], 1
    %136 = vsyncpa [#allocation6], 1

</llo_original>
